<compile_context>
chip_gen: v6e
topology: v6e:2x2x1
jax: 0.10.0
libtpu: 0.0.40
codegen_flags: <defaults>
</compile_context>

<pallas_src>
import functools

import jax
import jax.numpy as jnp
from jax.experimental import pallas as pl
from jax.experimental.pallas import tpu as pltpu


def _round_up(x, m):
    return (x + m - 1) // m * m


def _patch_embed_kernel(x_ref, w_ref, b_ref, o_ref):
    # x_ref: (TM, K_pad)    bf16 patch tile (streamed, double-buffered)
    # w_ref: (K_pad, E_pad) bf16 flattened conv weight (VMEM-resident, single buffer)
    # b_ref: (1, E_pad)     f32 bias (VMEM-resident, single buffer)
    # o_ref: (TM, E_pad)
    acc = jnp.dot(x_ref[...], w_ref[...], preferred_element_type=jnp.float32)
    o_ref[...] = (acc + b_ref[...]).astype(o_ref.dtype)


@functools.partial(jax.jit, static_argnames=("patch_size", "out_dtype"))
def patch_embedding(im, weight, bias, patch_size, out_dtype=None):
    """im: (B, C, H, W); weight: (E, C, P, P); bias: (E,) -> (B, N, E)."""
    B, C, H, W = im.shape
    E = weight.shape[0]
    P = patch_size
    GH, GW = H // P, W // P
    N = GH * GW
    M = B * N
    K = C * P * P
    if out_dtype is None:
        out_dtype = im.dtype
    out_dtype = jnp.dtype(out_dtype)
    compute_dtype = jnp.bfloat16

    # ---- padded sizes: lane-dense output / contraction, aligned row tiles --
    E_pad = _round_up(E, 128)
    K_pad = _round_up(K, 128)
    TM = 512
    if M < 2 * TM:
        # Shrink the row tile so the grid has >= 2 steps (v7x has 2 TensorCores
        # sharding the "parallel" axis); keep it a multiple of 16 (bf16 sublanes).
        TM = max(16, _round_up((M + 1) // 2, 16))
    M_pad = _round_up(M, TM)

    # ---- im2col (cast + unfold + pad fuse into one XLA producer fusion) ----
    # Flatten order per patch is (c, ph, pw), matching Conv2d weight order.
    x = im.astype(compute_dtype).reshape(B, C, GH, P, GW, P)
    x = jnp.transpose(x, (0, 2, 4, 1, 3, 5))          # (B, GH, GW, C, P, P)
    x = x.reshape(M, K)
    x = jnp.pad(x, ((0, M_pad - M), (0, K_pad - K)))  # zero pads: no-op math

    w = weight.astype(compute_dtype).reshape(E, K).T  # (K, E)
    w = jnp.pad(w, ((0, K_pad - K), (0, E_pad - E)))
    b = bias.astype(jnp.float32).reshape(1, E)
    b = jnp.pad(b, ((0, 0), (0, E_pad - E)))

    grid = (M_pad // TM,)

    # ---- VMEM budget from the actual footprint (not a blanket 48 MiB) ------
    out_itemsize = out_dtype.itemsize
    buf_bytes = (
        2 * TM * K_pad * 2               # x: double-buffered bf16 tiles
        + K_pad * E_pad * 2              # weight: single resident bf16 buffer
        + 8 * E_pad * 4                  # bias: single resident f32 buffer (sublane pad)
        + 2 * TM * E_pad * out_itemsize  # out: double-buffered tiles
    )
    vmem_limit = int(min(64 << 20, max(16 << 20, 2 * buf_bytes + (4 << 20))))

    cost = pl.CostEstimate(
        flops=2 * M_pad * K_pad * E_pad,
        transcendentals=0,
        bytes_accessed=(x.size * x.dtype.itemsize
                        + w.size * w.dtype.itemsize
                        + b.size * b.dtype.itemsize
                        + M_pad * E_pad * out_itemsize),
    )

    out = pl.pallas_call(
        _patch_embed_kernel,
        out_shape=jax.ShapeDtypeStruct((M_pad, E_pad), out_dtype),
        grid_spec=pltpu.PrefetchScalarGridSpec(
            num_scalar_prefetch=0,
            grid=grid,
            in_specs=[
                # streamed x tiles (default double-buffering overlaps DMA with MXU)
                pl.BlockSpec((TM, K_pad), lambda i: (i, 0)),
                # resident weight: constant block index -> single buffer is enough
                pl.BlockSpec((K_pad, E_pad), lambda i: (0, 0),
                             pipeline_mode=pl.Buffered(1)),
                # resident bias
                pl.BlockSpec((1, E_pad), lambda i: (0, 0),
                             pipeline_mode=pl.Buffered(1)),
            ],
            out_specs=pl.BlockSpec((TM, E_pad), lambda i: (i, 0)),
        ),
        compiler_params=pltpu.CompilerParams(
            dimension_semantics=("parallel",),
            vmem_limit_bytes=vmem_limit,
            # Let XLA fuse the cast+im2col producer into the kernel input so the
            # (M, K) bf16 matrix need not be materialized in HBM.
            allow_input_fusion=[True, False, False],
        ),
        cost_estimate=cost,
    )(x, w, b)

    out = out[:M, :E]
    return out.reshape(B, N, E)


if __name__ == "__main__":
    # Small shapes consistent with the module.
    B, C, H, W = 2, 4, 16, 16
    patch_size = 4
    embed_dim = 32

    key = jax.random.PRNGKey(0)
    k_im, k_w, k_b = jax.random.split(key, 3)

    im = jax.random.normal(k_im, (B, C, H, W), dtype=jnp.float32)
    # Deterministic synthetic Conv2d parameters (shape matches nn.Conv2d).
    weight = jax.random.normal(
        k_w, (embed_dim, C, patch_size, patch_size), dtype=jnp.float32) * 0.02
    bias = jax.random.normal(k_b, (embed_dim,), dtype=jnp.float32) * 0.02

    out = patch_embedding(im, weight, bias, patch_size)
    out = jax.block_until_ready(out)

    # Reference check against lax.conv (same semantics as nn.Conv2d stride=P),
    # computed in f32.  The kernel uses bf16 MXU inputs with f32 accumulation,
    # hence the loose tolerance.
    ref = jax.lax.conv_general_dilated(
        im, weight, window_strides=(patch_size, patch_size), padding="VALID",
        dimension_numbers=("NCHW", "OIHW", "NCHW"))
    ref = ref + bias[None, :, None, None]
    ref = ref.reshape(B, embed_dim, -1).transpose(0, 2, 1)

    assert out.shape == (B, (H // patch_size) * (W // patch_size), embed_dim)
    assert jnp.allclose(out, ref, atol=2e-2, rtol=2e-2)

    # Also exercise the bandwidth-optimized bf16-output path.
    out_bf16 = jax.block_until_ready(
        patch_embedding(im, weight, bias, patch_size, out_dtype=jnp.bfloat16))
    assert out_bf16.shape == out.shape
    assert jnp.allclose(out_bf16.astype(jnp.float32), ref, atol=5e-2, rtol=5e-2)

    print("KERNEL_OK")
</pallas_src>

<mosaic_0001>
module attributes {stable_mosaic.version = 11 : i64} {
  func.func @_patch_embed_kernel(%arg0: i32, %arg1: memref<16x128xbf16, #tpu.memory_space<vmem>>, %arg2: memref<128x128xbf16, #tpu.memory_space<vmem>>, %arg3: memref<1x128xf32, #tpu.memory_space<vmem>>, %arg4: memref<16x128xf32, #tpu.memory_space<vmem>>) attributes {dimension_semantics = [#tpu.dimension_semantics<parallel>], iteration_bounds = array<i64: 2>, scalar_prefetch = 0 : i64, scratch_operands = 0 : i64, tpu.core_type = #tpu.core_type<tc>, window_params = [{transform_indices = @transform_0, window_bounds = array<i64: 16, 128>}, {pipeline_mode = #tpu.pipeline_mode<synchronous>, transform_indices = @transform_1, window_bounds = array<i64: 128, 128>}, {pipeline_mode = #tpu.pipeline_mode<synchronous>, transform_indices = @transform_2, window_bounds = array<i64: 1, 128>}, {transform_indices = @transform_3, window_bounds = array<i64: 16, 128>}]} {
    %c0 = arith.constant 0 : index
    %c0_0 = arith.constant 0 : index
    %0 = vector.load %arg1[%c0, %c0_0] : memref<16x128xbf16, #tpu.memory_space<vmem>>, vector<16x128xbf16>
    %c0_1 = arith.constant 0 : index
    %c0_2 = arith.constant 0 : index
    %1 = vector.load %arg2[%c0_1, %c0_2] : memref<128x128xbf16, #tpu.memory_space<vmem>>, vector<128x128xbf16>
    %cst = arith.constant dense<0.000000e+00> : vector<16x128xf32>
    %2 = tpu.matmul %0, %1, %cst {dimension_numbers = #tpu.dot_dimension_numbers<[1], [0], [0], [1], [0, 0, 1, 1], [], []>} : vector<16x128xbf16>, vector<128x128xbf16>, vector<16x128xf32> -> vector<16x128xf32>
    %c0_3 = arith.constant 0 : index
    %c0_4 = arith.constant 0 : index
    %3 = vector.load %arg3[%c0_3, %c0_4] : memref<1x128xf32, #tpu.memory_space<vmem>>, vector<1x128xf32>
    %4 = vector.broadcast %3 : vector<1x128xf32> to vector<16x128xf32>
    %5 = arith.addf %2, %4 : vector<16x128xf32>
    %c0_5 = arith.constant 0 : index
    %c0_6 = arith.constant 0 : index
    %6 = vector.load %arg4[%c0_5, %c0_6] : memref<16x128xf32, #tpu.memory_space<vmem>>, vector<16x128xf32>
    tpu.vector_store %arg4[%c0_5, %c0_6], %5 {strides = array<i32>} : memref<16x128xf32, #tpu.memory_space<vmem>>, vector<16x128xf32>,
    return
  }
  func.func @transform_0(%arg0: i32) -> (i32, i32) {
    %c0_i32 = arith.constant 0 : i32
    %c0_i32_0 = arith.constant 0 : i32
    return %arg0, %c0_i32 : i32, i32
  }
  func.func @transform_1(%arg0: i32) -> (i32, i32) {
    %c0_i32 = arith.constant 0 : i32
    %c0_i32_0 = arith.constant 0 : i32
    %c0_i32_1 = arith.constant 0 : i32
    return %c0_i32, %c0_i32_0 : i32, i32
  }
  func.func @transform_2(%arg0: i32) -> (i32, i32) {
    %c0_i32 = arith.constant 0 : i32
    %c0_i32_0 = arith.constant 0 : i32
    %c0_i32_1 = arith.constant 0 : i32
    return %c0_i32, %c0_i32_0 : i32, i32
  }
  func.func @transform_3(%arg0: i32) -> (i32, i32) {
    %c0_i32 = arith.constant 0 : i32
    %c0_i32_0 = arith.constant 0 : i32
    return %arg0, %c0_i32 : i32, i32
  }
}

</mosaic_0001>

<llo_original>
// kernel: patch_embedding.2
$region0: #{patch_embedding.2}
  #allocation0 [shape = 'u32[]', space=smem, size = 0x4, offset = 0x4, fixed_abs, tag = 'smem constant byte address 0x4 - core index']
  #allocation1 [shape = 'u32[144,128]{1,0:T(1,128)}', space=vmem, size = 0x12000, scoped, tag = 'internal scratch']
  #allocation2 [shape = 'u32[2048]{0}', space=vmem, size = 0x2000, scoped, tag = 'scoped memory for patch_embedding.2']
  #allocation3 [shape = 'u32[2048]{0}', space=vmem, size = 0x2000, scoped, tag = 'scoped memory for patch_embedding.2']
  #allocation4 [shape = 'u32[2048]{0}', space=vmem, size = 0x2000, scoped, tag = 'scoped memory for patch_embedding.2']
  #allocation5 [shape = 'u32[2048]{0}', space=vmem, size = 0x2000, scoped, tag = 'scoped memory for patch_embedding.2']
  #allocation6 [shape = 'u32[2048]{0}', space=vmem, size = 0x2000, scoped, tag = 'scoped memory for patch_embedding.2']
  %s0 = inlined_call_operand.vmem [shape: bf16[128,128], index: 0, kind: input, shape index: {}]
  %s1 = inlined_call_operand.vmem [shape: f32[1,128], index: 1, kind: input, shape index: {}]
  %s2 = inlined_call_operand.vmem [shape: bf16[32,64], index: 2, kind: input, shape index: {}]
  %s3 = inlined_call_operand.<no memory space> [shape: bf16[], index: 3, kind: input, shape index: {}]
  %s4 = inlined_call_operand.hbm [shape: f32[32,128], index: 4, kind: output, shape index: {}]
  %s5 = sld [smem:[#allocation0]]
  $region45: #{patch_embedding.2} parent=0
    _
  %s7 = ssub.s32 1, %s5
  %s8 = scalar_select 0, %s7, %s5
  %v9 = vstv %s3
  %v10 = vunpack.i.l.bf16 %v9
  %v12 = vunpack.i.h.bf16 %v9
  $region1: #{patch_embedding.2} parent=0
    #allocation7 [shape = 'u8[16384]{0}', space=vmem, size = 0x4000, scoped, tag = 'output window, operand 0']
    #allocation8 [shape = 's32[2]{0}', space=sflag, size = 0x8, scoped, tag = 'scoped memory for patch_embedding.2']
    %14 = vsyncpa [#allocation8], 0
    %s15 = scalar_lea.sflag [#allocation8], 1
    %16 = vsyncpa %s15, 0
    loop: start=0, step=1, limit=4
    $region2: #{patch_embedding.2} parent=1 // loop_pre_header
      _
    $region3: #{patch_embedding.2} parent=1 // loop_header
      %s18 = sphi 0, %s22
      %p19 = scmp.ge.s32.totalorder %s18, 4
      %s28 = sphi 0, %s30
      %s31 = sphi 0, %s28
      %s32 = sphi 0, %s31
      %s48 = sphi 0, %s32
      %s52 = sphi 0, %s52
      %s54 = sphi 0, %s52
      %s55 = sphi 0, %s54
      %s69 = sphi 0, %s55
      %s73 = sphi 0, %s73
      %s75 = sphi 0, %s73
      %s76 = sphi 0, %s75
      %s90 = sphi 0, %s76
      %s96 = sphi 0, %s98
      %s99 = sphi 0, %s96
      %s100 = sphi 0, %s99
      %s116 = sphi 0, %s100
    $region4: #{patch_embedding.2} parent=1 // loop_header_branch
      %21 = sbr.rel (%p19) target = $region8
    $region5: #{patch_embedding.2} parent=1 // loop_body
      %s23 = ssub.s32 %s18, 1
      %s24 = ssub.s32 %s18, 2
      %s25 = sadd.s32 %s18, 1
      %s26 = ssub.s32 %s18, %s25
      %p27 = scmp.eq.s32.totalorder %s26, 0
      %s29 = sadd.s32 %s28, 1
      %s30 = scalar_select %p27, %s28, %s29
      %p33 = pneg %p27
      %p34 = scmp.eq.s32.totalorder %s18, 1
      %p35 = por %p33, %p34
      %p36 = scmp.ne.s32.totalorder %s28, %s31
      %p37 = scmp.eq.s32.totalorder %s18, 0
      %p38 = por %p36, %p37
      %p39 = scmp.ne.s32.totalorder %s28, %s31
      %p40 = scmp.eq.s32.totalorder %s23, 1
      %p41 = por %p39, %p40
      %p42 = scmp.ne.s32.totalorder %s31, %s32
      %p43 = scmp.eq.s32.totalorder %s23, 0
      %p44 = por %p42, %p43
      %p45 = scmp.ne.s32.totalorder %s31, %s32
      %p46 = scmp.eq.s32.totalorder %s24, 1
      %p47 = por %p45, %p46
      %p49 = scmp.ne.s32.totalorder %s32, %s48
      %p50 = scmp.eq.s32.totalorder %s24, 0
      %p51 = por %p49, %p50
      %s53 = sadd.s32 %s52, 1
      %p56 = scmp.eq.s32.totalorder %s18, 1
      %p57 = scmp.ne.s32.totalorder %s52, %s54
      %p58 = scmp.eq.s32.totalorder %s18, 0
      %p59 = por %p57, %p58
      %p60 = scmp.ne.s32.totalorder %s52, %s54
      %p61 = scmp.eq.s32.totalorder %s23, 1
      %p62 = por %p60, %p61
      %p63 = scmp.ne.s32.totalorder %s54, %s55
      %p64 = scmp.eq.s32.totalorder %s23, 0
      %p65 = por %p63, %p64
      %p66 = scmp.ne.s32.totalorder %s54, %s55
      %p67 = scmp.eq.s32.totalorder %s24, 1
      %p68 = por %p66, %p67
      %p70 = scmp.ne.s32.totalorder %s55, %s69
      %p71 = scmp.eq.s32.totalorder %s24, 0
      %p72 = por %p70, %p71
      %s74 = sadd.s32 %s73, 1
      %p77 = scmp.eq.s32.totalorder %s18, 1
      %p78 = scmp.ne.s32.totalorder %s73, %s75
      %p79 = scmp.eq.s32.totalorder %s18, 0
      %p80 = por %p78, %p79
      %p81 = scmp.ne.s32.totalorder %s73, %s75
      %p82 = scmp.eq.s32.totalorder %s23, 1
      %p83 = por %p81, %p82
      %p84 = scmp.ne.s32.totalorder %s75, %s76
      %p85 = scmp.eq.s32.totalorder %s23, 0
      %p86 = por %p84, %p85
      %p87 = scmp.ne.s32.totalorder %s75, %s76
      %p88 = scmp.eq.s32.totalorder %s24, 1
      %p89 = por %p87, %p88
      %p91 = scmp.ne.s32.totalorder %s76, %s90
      %p92 = scmp.eq.s32.totalorder %s24, 0
      %p93 = por %p91, %p92
      %s94 = ssub.s32 %s18, %s25
      %p95 = scmp.eq.s32.totalorder %s94, 0
      %s97 = sadd.s32 %s96, 1
      %s98 = scalar_select %p95, %s96, %s97
      %p101 = pneg %p95
      %p102 = scmp.eq.s32.totalorder %s18, 1
      %p103 = por %p101, %p102
      %p104 = scmp.ne.s32.totalorder %s96, %s99
      %p105 = scmp.eq.s32.totalorder %s18, 0
      %p106 = por %p104, %p105
      %p107 = scmp.ne.s32.totalorder %s96, %s99
      %p108 = scmp.eq.s32.totalorder %s23, 1
      %p109 = por %p107, %p108
      %p110 = scmp.ne.s32.totalorder %s99, %s100
      %p111 = scmp.eq.s32.totalorder %s23, 0
      %p112 = por %p110, %p111
      %p113 = scmp.ne.s32.totalorder %s99, %s100
      %p114 = scmp.eq.s32.totalorder %s24, 1
      %p115 = por %p113, %p114
      %p117 = scmp.ne.s32.totalorder %s100, %s116
      %p118 = scmp.eq.s32.totalorder %s24, 0
      %p119 = por %p117, %p118
      %p120 = scmp.le.s32.totalorder 1, %s18
      %p121 = scmp.lt.s32.totalorder %s18, 3
      %p122 = pnand %p120, %p121
      %p123 = pneg %p122
      // Predicated region
      $region9: #{patch_embedding.2} parent=5 // pred_check
        _
      $region10: #{patch_embedding.2} parent=5 // pred_check_branch
        %125 = sbr.rel (%p122) target = $region12
      $region11: #{patch_embedding.2} parent=5 // pred_region
        %s126 = ssub.s32 %s18, 1
        // Predicated region
        $region13: #{patch_embedding.2} parent=11 // pred_check
          %p127 = pneg %p65
        $region14: #{patch_embedding.2} parent=11 // pred_check_branch
          %129 = sbr.rel (%p127) target = $region16
        $region15: #{patch_embedding.2} parent=11 // pred_region
          _
        $region16: #{patch_embedding.2} parent=11 // pred_fallthru
          _
        // Predicated region
        $region17: #{patch_embedding.2} parent=11 // pred_check
          %p130 = pneg %p86
        $region18: #{patch_embedding.2} parent=11 // pred_check_branch
          %132 = sbr.rel (%p130) target = $region20
        $region19: #{patch_embedding.2} parent=11 // pred_region
          _
        $region20: #{patch_embedding.2} parent=11 // pred_fallthru
          _
      $region12: #{patch_embedding.2} parent=5 // pred_fallthru
        _
      %p133 = scmp.lt.s32.totalorder %s18, 2
      // Predicated region
      $region21: #{patch_embedding.2} parent=5 // pred_check
        %p134 = pneg %p133
      $region22: #{patch_embedding.2} parent=5 // pred_check_branch
        %136 = sbr.rel (%p134) target = $region24
      $region23: #{patch_embedding.2} parent=5 // pred_region
        // Predicated region
        $region25: #{patch_embedding.2} parent=23 // pred_check
          %p137 = pneg %p38
        $region26: #{patch_embedding.2} parent=23 // pred_check_branch
          %139 = sbr.rel (%p137) target = $region28
        $region27: #{patch_embedding.2} parent=23 // pred_region
          %s140 = smul.u32 2, %s18
          %p141 = scmp.lt.s32.totalorder %s140, 3
          %s142 = scalar_select %p141, %s140, 3
          %s143 = smul.addr %s142, 4
          %s144 = scalar_lea.vmem %s2, %s143
          %s145 = smul.u32 2, %s18
        $region28: #{patch_embedding.2} parent=23 // pred_fallthru
          _
      $region24: #{patch_embedding.2} parent=5 // pred_fallthru
        _
      %p146 = scmp.le.s32.totalorder 1, %s18
      %p147 = scmp.lt.s32.totalorder %s18, 3
      %p148 = pnand %p146, %p147
      %p149 = pneg %p148
      // Predicated region
      $region29: #{patch_embedding.2} parent=5 // pred_check
        _
      $region30: #{patch_embedding.2} parent=5 // pred_check_branch
        %151 = sbr.rel (%p148) target = $region32
      $region31: #{patch_embedding.2} parent=5 // pred_region
        #allocation9 [shape = 'u8[4096]{0}', space=vmem, size = 0x1000, dematerialized = true, scoped, tag = 'FusionAdapter Buffer %fusion.1 = bf16[32,128]{1,0:T(8,128)(2,1)} fusion(%param_2.1, %param_3), kind=kLoop, calls=%fused_computation.2.clone, metadata={op_name="jit(patch_embedding)/jit(_pad)/pad" stack_frame_id=10}']
        %s152 = ssub.s32 %s18, 1
        %s153 = smul.u32 2, %s23
        %p154 = scmp.lt.s32.totalorder %s153, 3
        %s155 = scalar_select %p154, %s153, 3
        %s156 = smul.addr %s155, 4
        %s157 = scalar_lea.vmem %s2, %s156
        %p158 = pneg %p44
        %p159 = pneg %p41
        %p160 = pneg %p65
        %p161 = pneg %p62
        %p162 = pneg %p86
        %p163 = pneg %p83
        %p164 = pneg %p112
        %p165 = pneg %p109
        %s166 = sand.u32 %s99, 1
        %s167 = scalar_lea.sflag [#allocation8], %s166
        %s168 = sand.u32 %s99, 1
        %s169 = smul.addr %s168, 16
        %s170 = scalar_lea.vmem [#allocation7], %s169
        %s171 = smul.u32 2, %s23
        %p172 = scmp.lt.s32.totalorder %s171, 3
        %s173 = scalar_select %p172, %s171, 3
        %s174 = smul.addr %s173, 4
        %s175 = scalar_lea.vmem %s2, %s174
        %s176 = smul.u32 2, %s23
        %s177 = smul.u32 2, %s23
        %s179 = sor.u32 255, 127
        %s180 = sand.u32 %s179, 85
        %s181 = sshrl.u32 %s180, 1
        %s182 = sor.u32 %s180, %s181
        %s183 = sand.u32 51, %s182
        %s184 = sshrl.u32 %s183, 2
        %s185 = sor.u32 %s183, %s184
        %s186 = sand.u32 15, %s185
        %v187 = vld [vmem:[%s175] sm:%s186]
        %v188 = vunpack.c.l.bf16 %v187
        %v189 = vunpack.c.h.bf16 %v187
        %v190 = vlaneseq
        %v191 = vand.u32 %v190, 127
        %vm193 = vcmp.lt.s32.totalorder %v191, 64
        %v194 = vsel %vm193, %v188, %v10
        %v195 = vpack.c.bf16 0.0, %v194
        %s197 = ssub.s32 16, 1
        %198 = vst [vmem:[#allocation9] sm:%s197] %v195
        %s199 = scalar_lea.vmem %s175, 4
        %s201 = sor.u32 255, 127
        %s202 = sand.u32 %s201, 85
        %s203 = sshrl.u32 %s202, 1
        %s204 = sor.u32 %s202, %s203
        %s205 = sand.u32 51, %s204
        %s206 = sshrl.u32 %s205, 2
        %s207 = sor.u32 %s205, %s206
        %s208 = sand.u32 15, %s207
        %v209 = vld [vmem:[%s199] sm:%s208]
        %v210 = vunpack.c.l.bf16 %v209
        %v211 = vunpack.c.h.bf16 %v209
        %v212 = vlaneseq
        %v213 = vand.u32 %v212, 127
        %vm215 = vcmp.lt.s32.totalorder %v213, 64
        %v216 = vsel %vm215, %v210, %v10
        %s217 = scalar_lea.vmem [#allocation9], 4
        %v218 = vpack.c.bf16 0.0, %v216
        %s220 = ssub.s32 16, 1
        %221 = vst [vmem:[%s217] sm:%s220] %v218
        %v223 = vld [vmem:[#allocation9] sm:$0xf]
        %v224 = vld [vmem:[#allocation9 + $0x4] sm:$0xf]
        %v225 = vld [vmem:[%s0] sm:$0xf]
        %v226 = vld [vmem:[%s0 + $0x4] sm:$0xf]
        %v227 = vld [vmem:[%s0 + $0x8] sm:$0xf]
        %v228 = vld [vmem:[%s0 + $0xc] sm:$0xf]
        %v229 = vld [vmem:[%s0 + $0x10] sm:$0xf]
        %v230 = vld [vmem:[%s0 + $0x14] sm:$0xf]
        %v231 = vld [vmem:[%s0 + $0x18] sm:$0xf]
        %v232 = vld [vmem:[%s0 + $0x1c] sm:$0xf]
        %v233 = vld [vmem:[%s0 + $0x20] sm:$0xf]
        %v234 = vld [vmem:[%s0 + $0x24] sm:$0xf]
        %v235 = vld [vmem:[%s0 + $0x28] sm:$0xf]
        %v236 = vld [vmem:[%s0 + $0x2c] sm:$0xf]
        %v237 = vld [vmem:[%s0 + $0x30] sm:$0xf]
        %v238 = vld [vmem:[%s0 + $0x34] sm:$0xf]
        %v239 = vld [vmem:[%s0 + $0x38] sm:$0xf]
        %v240 = vld [vmem:[%s0 + $0x3c] sm:$0xf]
        %v241 = vld [vmem:[%s1] sm:$0x1]
        %v243 = vlaneseq
        %v244 = vshrl.u32 %v243, 7
        %v245 = vsub.s32 0, %v244
        %v246 = vrot.slane %v241, %v245
        %v250 = vunpack.c.l.b16 %v223
        %v251 = vunpack.c.l.b16 %v224
        %v252 = vpack.c.b16 %v251, %v250
        %v270 = vunpack.c.l.b16 %v225
        %v271 = vunpack.c.l.b16 %v226
        %v272 = vunpack.c.l.b16 %v227
        %v273 = vunpack.c.l.b16 %v228
        %v274 = vunpack.c.l.b16 %v229
        %v275 = vunpack.c.l.b16 %v230
        %v276 = vunpack.c.l.b16 %v231
        %v277 = vunpack.c.l.b16 %v232
        %v278 = vunpack.c.l.b16 %v233
        %v279 = vunpack.c.l.b16 %v234
        %v280 = vunpack.c.l.b16 %v235
        %v281 = vunpack.c.l.b16 %v236
        %v282 = vunpack.c.l.b16 %v237
        %v283 = vunpack.c.l.b16 %v238
        %v284 = vunpack.c.l.b16 %v239
        %v285 = vunpack.c.l.b16 %v240
        %v286 = vpack.c.b16 %v271, %v270
        %v287 = vpack.c.b16 %v273, %v272
        %v288 = vpack.c.b16 %v275, %v274
        %v289 = vpack.c.b16 %v277, %v276
        %v290 = vpack.c.b16 %v279, %v278
        %v291 = vpack.c.b16 %v281, %v280
        %v292 = vpack.c.b16 %v283, %v282
        %v293 = vpack.c.b16 %v285, %v284
        %302 = vmatprep.subr.bf16.mxu0 0
        %303 = vmatpush1.bf16.msra.mxu0 %v293
        %304 = vmatprep.subr.bf16.mxu0 0
        %305 = vmatpush1.bf16.msra.mxu0 %v292
        %306 = vmatprep.subr.bf16.mxu0 0
        %307 = vmatpush1.bf16.msra.mxu0 %v291
        %308 = vmatprep.subr.bf16.mxu0 0
        %309 = vmatpush1.bf16.msra.mxu0 %v290
        %310 = vmatprep.subr.bf16.mxu0 0
        %311 = vmatpush1.bf16.msra.mxu0 %v289
        %312 = vmatprep.subr.bf16.mxu0 0
        %313 = vmatpush1.bf16.msra.mxu0 %v288
        %314 = vmatprep.subr.bf16.mxu0 0
        %315 = vmatpush1.bf16.msra.mxu0 %v287
        %316 = vmatprep.subr.bf16.mxu0 0
        %317 = vmatpush1.bf16.msra.mxu0 %v286
        %318 = vmatprep.subr.bf16.mxu0 0
        %319 = vmatpush2.bf16.msra.mxu0 0
        %320 = vmatprep.subr.bf16.mxu0 0
        %321 = vmatpush2.bf16.msra.mxu0 0
        %322 = vmatprep.subr.bf16.mxu0 0
        %323 = vmatpush2.bf16.msra.mxu0 0
        %324 = vmatprep.subr.bf16.mxu0 0
        %325 = vmatpush2.bf16.msra.mxu0 0
        %326 = vmatprep.subr.bf16.mxu0 0
        %327 = vmatpush2.bf16.msra.mxu0 0
        %328 = vmatprep.subr.bf16.mxu0 0
        %329 = vmatpush2.bf16.msra.mxu0 0
        %330 = vmatprep.subr.bf16.mxu0 0
        %331 = vmatpush2.bf16.msra.mxu0 0
        %332 = vmatprep.subr.bf16.mxu0 0
        %333 = vmatpush2.bf16.msra.mxu0 0
        %334 = vmatprep.mubr.bf16.mxu0 0
        %335 = vmatmul.mubr.bf16.gmra.mxu0 %v252
        %v336 = vpop.f32.mrf.mxu0
        %v337 = vadd.f32 %v246, %v336
        %v338 = vpop.f32.mrf.mxu0
        %v339 = vpop.f32.mrf.mxu0
        %v340 = vadd.f32 %v246, %v339
        %v341 = vpop.f32.mrf.mxu0
        %342 = vdwg.mxu0
        %343 = vst [vmem:[%s170] sm:$0xff] %v337
        %344 = vst [vmem:[%s170 + $0x8] sm:$0xff] %v340
        %s345 = sand.u32 %s99, 1
        %s346 = scalar_lea.sflag [#allocation8], %s345
        %s347 = sand.u32 %s99, 1
        %s348 = smul.addr %s347, 16
        %s349 = scalar_lea.vmem [#allocation7], %s348
        // Predicated region
        $region33: #{patch_embedding.2} parent=31 // pred_check
          %p350 = pneg %p109
        $region34: #{patch_embedding.2} parent=31 // pred_check_branch
          %352 = sbr.rel (%p350) target = $region36
        $region35: #{patch_embedding.2} parent=31 // pred_region
          %s353 = smul.u32 2, %s23
          %s355 = ssub.s32 256, 256
          %356 = vsyncadd %s346, %s355
          %s357 = smul.addr %s353, 128
          %s358 = scalar_lea.hbm %s4, %s357
          %s359 = sshll.u32 %s349, 4
          %s360 = int_to_ptr.vmem [resolvable:$true] %s359
          %365 = dma.vmem_to_hbm [thread:$0]  %s360, 256, %s358, %s346, 128, 128, 8
        $region36: #{patch_embedding.2} parent=31 // pred_fallthru
          _
      $region32: #{patch_embedding.2} parent=5 // pred_fallthru
        _
      %p366 = scmp.le.s32.totalorder 2, %s18
      // Predicated region
      $region37: #{patch_embedding.2} parent=5 // pred_check
        %p367 = pneg %p366
      $region38: #{patch_embedding.2} parent=5 // pred_check_branch
        %369 = sbr.rel (%p367) target = $region40
      $region39: #{patch_embedding.2} parent=5 // pred_region
        %s370 = ssub.s32 %s18, 2
        // Predicated region
        $region41: #{patch_embedding.2} parent=39 // pred_check
          %p371 = pneg %p115
        $region42: #{patch_embedding.2} parent=39 // pred_check_branch
          %373 = sbr.rel (%p371) target = $region44
        $region43: #{patch_embedding.2} parent=39 // pred_region
          %s374 = sand.u32 %s100, 1
          %s375 = scalar_lea.sflag [#allocation8], %s374
          %s376 = sand.u32 %s100, 1
          %s377 = smul.addr %s376, 16
          %s378 = scalar_lea.vmem [#allocation7], %s377
          %379 = dma.done %s375, 256
        $region44: #{patch_embedding.2} parent=39 // pred_fallthru
          _
      $region40: #{patch_embedding.2} parent=5 // pred_fallthru
        _
    $region6: #{patch_embedding.2} parent=1 // loop_footer
      %s22 = sadd.s32 1, %s18
    $region7: #{patch_embedding.2} parent=1 // loop_footer_branch
      %17 = sbr.rel target = $region3
    $region8: #{patch_embedding.2} parent=1 // loop_exit
      _
    %380 = vsyncpa [#allocation8], 1
    %s381 = scalar_lea.sflag [#allocation8], 1
    %382 = vsyncpa %s381, 1

</llo_original>
